<compile_context>
chip_gen: v7x
topology: tpu7x:2x2x1
jax: 0.10.0
libtpu: 0.0.40
codegen_flags: <defaults>
</compile_context>

<pallas_src>
import math

import jax
import jax.numpy as jnp
from jax.experimental import pallas as pl
from jax.experimental.pallas import tpu as pltpu


def _rup(x, m):
    return ((x + m - 1) // m) * m


def _gelu_exact(x):
    # exact (erf-based) GELU, matching torch.nn.GELU() default
    return 0.5 * x * (1.0 + jax.lax.erf(x * (1.0 / math.sqrt(2.0))))


# ----------------------------------------------------------------------------
# Packing plan (all offsets / widths are compile-time Python ints, 128-aligned)
# ----------------------------------------------------------------------------
def _plan(cfg):
    enc = list(cfg["encoder_vector_sizes"])
    in_size = cfg["input_size"]
    T, NB = cfg["num_timesteps"], cfg["num_bands"]
    H, nh = cfg["hidden_vector_size"], cfg["num_hidden_layers"]
    cpg = cfg["num_channels_per_group"]
    if isinstance(cpg, int):
        cpg = [cpg for _ in enc]
    cpg = list(cpg)
    tnb = T * NB

    in_pad = _rup(in_size, 128)
    e_pads = [_rup(e, 128) for e in enc]
    fan_ins = [in_size] + enc[:-1]
    fan_pads = [in_pad] + e_pads[:-1]

    # fused head: [sigmoid section: gamma_0 | beta_0] [pad] [GELU: gammas | betas]
    sig_w = 2 * tnb
    gelu_w = 2 * nh * H
    sig_pad = _rup(sig_w, 128)
    gelu_pad = _rup(gelu_w, 128)
    HO_pad = sig_pad + gelu_pad

    # weight buffer: [W'_0 | P_0 | W'_1 | P_1 | ... | W'_head], 128-aligned lanes
    w_offs, p_offs, col = [], [], 0
    for ep in e_pads:
        w_offs.append(col); col += ep
        p_offs.append(col); col += ep
    wh_off = col; col += HO_pad
    LW = col
    R = max([in_pad] + e_pads)            # already a multiple of 128

    # bias buffer: [b'_0 | ... | b'_head | sigmoid-offsets]
    b_offs, col = [], 0
    for ep in e_pads:
        b_offs.append(col); col += ep
    bh_off = col; col += HO_pad
    off_off = col; col += sig_pad
    LB = col

    return dict(enc=enc, fan_ins=fan_ins, fan_pads=fan_pads, e_pads=e_pads,
                cpg=cpg, in_size=in_size, in_pad=in_pad, tnb=tnb,
                nh=nh, H=H, T=T, NB=NB,
                sig_w=sig_w, gelu_w=gelu_w, sig_pad=sig_pad,
                gelu_pad=gelu_pad, HO_pad=HO_pad,
                w_offs=w_offs, p_offs=p_offs, wh_off=wh_off, LW=LW, R=R,
                b_offs=b_offs, bh_off=bh_off, off_off=off_off, LB=LB)


# ----------------------------------------------------------------------------
# Parameter init (PyTorch-Linear-style uniform bounds), layout (in, out)
# ----------------------------------------------------------------------------
def init_params(key, cfg):
    enc_sizes = cfg["encoder_vector_sizes"]
    in_size = cfg["input_size"]
    T, NB = cfg["num_timesteps"], cfg["num_bands"]
    H, nh = cfg["hidden_vector_size"], cfg["num_hidden_layers"]

    def linear(k, fan_in, fan_out):
        kw, kb = jax.random.split(k)
        bound = 1.0 / math.sqrt(fan_in)
        w = jax.random.uniform(kw, (fan_in, fan_out), jnp.float32, -bound, bound)
        b = jax.random.uniform(kb, (1, fan_out), jnp.float32, -bound, bound)
        return w, b

    keys = iter(jax.random.split(key, 64))
    params = {}
    prev = in_size
    for l, e in enumerate(enc_sizes):
        params[f"enc{l}_w"], params[f"enc{l}_b"] = linear(next(keys), prev, e)
        # GroupNorm affine (PyTorch init is 1/0; perturb slightly so the
        # affine-folding path is actually exercised).
        params[f"enc{l}_gn_w"] = 1.0 + 0.05 * jax.random.normal(
            next(keys), (1, e), jnp.float32)
        params[f"enc{l}_gn_b"] = 0.05 * jax.random.normal(
            next(keys), (1, e), jnp.float32)
        prev = e

    elast = enc_sizes[-1]
    params["gamma0_w"], params["gamma0_b"] = linear(next(keys), elast, T * NB)
    params["beta0_w"], params["beta0_b"] = linear(next(keys), elast, T * NB)
    for i in range(1, nh + 1):
        params[f"gamma{i}_w"], params[f"gamma{i}_b"] = linear(next(keys), elast, H)
        params[f"beta{i}_w"], params[f"beta{i}_b"] = linear(next(keys), elast, H)
    return params


# ----------------------------------------------------------------------------
# Host-side packing: fold GN affine downstream, build P matrices & offsets,
# pack everything into two buffers (done ONCE, reused across calls).
# NOTE: padded weight columns / bias lanes MUST stay exactly 0 (load-bearing:
# keeps padded activation lanes at 0 through GELU / stats / normalize).
# ----------------------------------------------------------------------------
def pack_params(params, cfg, plan=None):
    p = plan if plan is not None else _plan(cfg)
    enc, fan_ins, cpg = p["enc"], p["fan_ins"], p["cpg"]
    nh, tnb = p["nh"], p["tnb"]

    # Fold layer-l GroupNorm affine into the NEXT linear:
    #   (zn*g + b) @ W  ==  zn @ (diag(g) W)  +  (b @ W)
    Ws, bs = [], []
    gn_w = gn_b = None
    for l, e in enumerate(enc):
        W = params[f"enc{l}_w"]
        b = params[f"enc{l}_b"]
        if gn_w is not None:
            b = gn_b @ W + b
            W = gn_w.reshape(-1, 1) * W
        Ws.append(W)
        bs.append(b)
        gn_w = params[f"enc{l}_gn_w"][0]
        gn_b = params[f"enc{l}_gn_b"]

    # Fused head: [gamma_0 | beta_0 | gamma_1..nh | beta_1..nh]
    Wh = jnp.concatenate(
        [params["gamma0_w"], params["beta0_w"]]
        + [params[f"gamma{i}_w"] for i in range(1, nh + 1)]
        + [params[f"beta{i}_w"] for i in range(1, nh + 1)], axis=1)
    bh = jnp.concatenate(
        [params["gamma0_b"], params["beta0_b"]]
        + [params[f"gamma{i}_b"] for i in range(1, nh + 1)]
        + [params[f"beta{i}_b"] for i in range(1, nh + 1)], axis=1)
    bh = gn_b @ Wh + bh          # fold last layer's GN affine into the head
    Wh = gn_w.reshape(-1, 1) * Wh

    Wp = jnp.zeros((p["R"], p["LW"]), jnp.float32)
    Bp = jnp.zeros((1, p["LB"]), jnp.float32)
    for l, e in enumerate(enc):
        k = fan_ins[l]
        Wp = Wp.at[:k, p["w_offs"][l]:p["w_offs"][l] + e].set(Ws[l])
        # group-averaging projection P (1/cpg folded in): mean = z @ P
        idx = jnp.arange(e) // cpg[l]
        proj = (idx[:, None] == idx[None, :]).astype(jnp.float32) / cpg[l]
        Wp = Wp.at[:e, p["p_offs"][l]:p["p_offs"][l] + e].set(proj)
        Bp = Bp.at[:, p["b_offs"][l]:p["b_offs"][l] + e].set(bs[l])

    e_last = enc[-1]
    sig_w, sig_pad, gelu_w = p["sig_w"], p["sig_pad"], p["gelu_w"]
    wh_off, bh_off = p["wh_off"], p["bh_off"]
    # sigmoid section (gamma_0 | beta_0) at lane offset 0
    Wp = Wp.at[:e_last, wh_off:wh_off + sig_w].set(Wh[:, :sig_w])
    Bp = Bp.at[:, bh_off:bh_off + sig_w].set(bh[:, :sig_w])
    # GELU section (gamma_1..nh | beta_1..nh) at 128-aligned offset sig_pad
    Wp = Wp.at[:e_last, wh_off + sig_pad:wh_off + sig_pad + gelu_w].set(
        Wh[:, sig_w:])
    Bp = Bp.at[:, bh_off + sig_pad:bh_off + sig_pad + gelu_w].set(bh[:, sig_w:])
    # gamma_0 head has sum_from=1, beta_0 has sum_from=0
    Bp = Bp.at[0, p["off_off"]:p["off_off"] + tnb].set(1.0)
    return Wp, Bp


# ----------------------------------------------------------------------------
# Kernel
# ----------------------------------------------------------------------------
def make_kernel(plan, eps=1e-5):
    enc = plan["enc"]
    e_pads, fan_pads = plan["e_pads"], plan["fan_pads"]

    def kernel(x_ref, w_ref, b_ref, o_ref):
        h = x_ref[...]                                          # (TM, in_pad) f32

        # [Linear(+folded affine) -> GELU -> GroupNorm-normalize] * n_layers
        # All slices below are full 128-lane tiles (padded lanes are zeros).
        for l, _ in enumerate(enc):
            kp, ep = fan_pads[l], e_pads[l]
            wo, po, bo = plan["w_offs"][l], plan["p_offs"][l], plan["b_offs"][l]
            w = w_ref[0:kp, wo:wo + ep]                         # (kp, ep)
            b = b_ref[:, bo:bo + ep]                            # (1, ep)
            z = _gelu_exact(
                jnp.dot(h, w, preferred_element_type=jnp.float32) + b)
            # GroupNorm stats via the averaging matrix P: two dots, no concat.
            proj = w_ref[0:ep, po:po + ep]                      # (ep, ep)
            mean = jnp.dot(z, proj, preferred_element_type=jnp.float32)
            ex2 = jnp.dot(z * z, proj, preferred_element_type=jnp.float32)
            var = jnp.maximum(ex2 - mean * mean, 0.0)           # clamp one-pass var
            h = (z - mean) * jax.lax.rsqrt(var + eps)
            # affine folded into the next matmul; Dropout = identity (eval)

        # Fused heads: one matmul, static lane-aligned sigmoid / GELU split.
        ep_last = e_pads[-1]
        HO_pad, sig_pad = plan["HO_pad"], plan["sig_pad"]
        wh = w_ref[0:ep_last, plan["wh_off"]:plan["wh_off"] + HO_pad]
        bh = b_ref[:, plan["bh_off"]:plan["bh_off"] + HO_pad]
        zh = jnp.dot(h, wh, preferred_element_type=jnp.float32) + bh
        off = b_ref[:, plan["off_off"]:plan["off_off"] + sig_pad]
        o_ref[:, 0:sig_pad] = jax.nn.sigmoid(zh[:, 0:sig_pad]) + off
        o_ref[:, sig_pad:HO_pad] = _gelu_exact(zh[:, sig_pad:HO_pad])

    return kernel


# ----------------------------------------------------------------------------
# Wrappers
# ----------------------------------------------------------------------------
def make_task_encoder_apply(cfg):
    """Returns a jitted batched forward: (X (M,in), Wp, Bp) -> (M, HO_pad)."""
    plan = _plan(cfg)

    @jax.jit
    def apply_fn(X, Wp, Bp):
        M = X.shape[0]
        in_size, in_pad = plan["in_size"], plan["in_pad"]

        # Large row tile (amortize ~0.35us/step), but keep >=2 grid steps when
        # the batch allows it so v7x's two TensorCores both get work.
        M_pad8 = _rup(max(M, 8), 8)
        TM = min(1024, M_pad8)
        if M_pad8 >= 16:
            TM = min(TM, _rup(M_pad8, 16) // 2)
        TM = _rup(TM, 8)
        M_pad = _rup(M_pad8, TM)

        Xp = jnp.pad(X.astype(jnp.float32),
                     ((0, M_pad - M), (0, in_pad - in_size)))

        out = pl.pallas_call(
            make_kernel(plan),
            out_shape=jax.ShapeDtypeStruct((M_pad, plan["HO_pad"]), jnp.float32),
            grid=(M_pad // TM,),
            in_specs=[
                pl.BlockSpec((TM, in_pad), lambda i: (i, 0)),
                pl.BlockSpec((plan["R"], plan["LW"]), lambda i: (0, 0)),
                pl.BlockSpec((1, plan["LB"]), lambda i: (0, 0)),
            ],
            out_specs=pl.BlockSpec((TM, plan["HO_pad"]), lambda i: (i, 0)),
            compiler_params=pltpu.CompilerParams(
                dimension_semantics=("parallel",)),
        )(Xp, Wp, Bp)
        return out[:M]

    return apply_fn


def split_outputs(row, cfg):
    """Split one fused head row into (gammas, betas) lists (module semantics)."""
    T, NB = cfg["num_timesteps"], cfg["num_bands"]
    H, nh = cfg["hidden_vector_size"], cfg["num_hidden_layers"]
    tnb = T * NB
    sig_pad = _rup(2 * tnb, 128)
    gammas = [row[:tnb].reshape(T, NB)]
    betas = [row[tnb:2 * tnb].reshape(T, NB)]
    base_g = sig_pad
    base_b = sig_pad + nh * H
    for i in range(nh):
        gammas.append(row[base_g + i * H: base_g + (i + 1) * H])
    for i in range(nh):
        betas.append(row[base_b + i * H: base_b + (i + 1) * H])
    return gammas, betas


# ----------------------------------------------------------------------------
# Pure-JAX reference (eval-mode PyTorch semantics)
# ----------------------------------------------------------------------------
def reference_forward(x, params, cfg):
    enc_sizes = cfg["encoder_vector_sizes"]
    cpg = cfg["num_channels_per_group"]
    if isinstance(cpg, int):
        cpg = [cpg for _ in enc_sizes]
    T, NB = cfg["num_timesteps"], cfg["num_bands"]
    nh = cfg["num_hidden_layers"]
    eps = 1e-5

    h = x[None, :]
    for l, e in enumerate(enc_sizes):
        z = h @ params[f"enc{l}_w"] + params[f"enc{l}_b"]
        z = _gelu_exact(z)
        g = e // cpg[l]
        zg = z.reshape(g, cpg[l])
        mean = zg.mean(1, keepdims=True)
        var = ((zg - mean) ** 2).mean(1, keepdims=True)
        zn = (zg - mean) / jnp.sqrt(var + eps)
        h = zn.reshape(1, e) * params[f"enc{l}_gn_w"] + params[f"enc{l}_gn_b"]
    v = h[0]

    gammas = [(1.0 + jax.nn.sigmoid(
        v @ params["gamma0_w"] + params["gamma0_b"][0])).reshape(T, NB)]
    betas = [(0.0 + jax.nn.sigmoid(
        v @ params["beta0_w"] + params["beta0_b"][0])).reshape(T, NB)]
    for i in range(1, nh + 1):
        gammas.append(_gelu_exact(v @ params[f"gamma{i}_w"]
                                  + params[f"gamma{i}_b"][0]))
    for i in range(1, nh + 1):
        betas.append(_gelu_exact(v @ params[f"beta{i}_w"]
                                 + params[f"beta{i}_b"][0]))
    return gammas, betas


if __name__ == "__main__":
    cfg = dict(
        input_size=32,
        encoder_vector_sizes=[64, 128],
        num_bands=8,
        num_hidden_layers=2,
        hidden_vector_size=32,
        encoder_dropout=0.1,          # Dropout is identity in eval mode
        num_timesteps=8,
        num_channels_per_group=[16, 16],
    )

    key = jax.random.PRNGKey(0)
    k_x, k_p, k_b, k_l = jax.random.split(key, 4)
    params = init_params(k_p, cfg)
    plan = _plan(cfg)
    Wp, Bp = pack_params(params, cfg, plan)     # host-side packing, done once
    apply_fn = make_task_encoder_apply(cfg)     # jitted wrapper, built once

    def check_row(row, ref_g, ref_b):
        g_r, b_r = split_outputs(row, cfg)
        for got, ref in zip(g_r + b_r, ref_g + ref_b):
            assert got.shape == ref.shape, (got.shape, ref.shape)
            assert jnp.allclose(got, ref, atol=2e-4, rtol=2e-4), float(
                jnp.max(jnp.abs(got - ref)))

    # --- single-task path (matches the PyTorch module's forward) ---
    x = jax.random.normal(k_x, (cfg["input_size"],), jnp.float32)
    out1 = apply_fn(x.reshape(1, -1), Wp, Bp)
    jax.block_until_ready(out1)
    rg, rb = reference_forward(x, params, cfg)
    check_row(out1[0], rg, rb)

    # --- small batched path (many tasks, one kernel launch) ---
    Xb = jax.random.normal(k_b, (5, cfg["input_size"]), jnp.float32)
    outb = apply_fn(Xb, Wp, Bp)
    jax.block_until_ready(outb)
    for r in range(Xb.shape[0]):
        rg, rb = reference_forward(Xb[r], params, cfg)
        check_row(outb[r], rg, rb)

    # --- larger batch: exercises the >=2-step parallel grid / big row tile ---
    Xl = jax.random.normal(k_l, (384, cfg["input_size"]), jnp.float32)
    outl = apply_fn(Xl, Wp, Bp)
    jax.block_until_ready(outl)
    assert outl.shape[0] == 384 and bool(jnp.all(jnp.isfinite(outl)))
    for r in (0, 191, 383):   # spot-check rows from both grid tiles
        rg, rb = reference_forward(Xl[r], params, cfg)
        check_row(outl[r], rg, rb)

    print("KERNEL_OK")
</pallas_src>

<mosaic_0001>
module attributes {stable_mosaic.version = 11 : i64} {
  func.func @kernel(%arg0: i32, %arg1: memref<8x128xf32, #tpu.memory_space<vmem>>, %arg2: memref<128x768xf32, #tpu.memory_space<vmem>>, %arg3: memref<1x640xf32, #tpu.memory_space<vmem>>, %arg4: memref<8x256xf32, #tpu.memory_space<vmem>>) attributes {dimension_semantics = [#tpu.dimension_semantics<parallel>], iteration_bounds = array<i64: 1>, scalar_prefetch = 0 : i64, scratch_operands = 0 : i64, tpu.core_type = #tpu.core_type<tc>, window_params = [{transform_indices = @transform_0, window_bounds = array<i64: 8, 128>}, {pipeline_mode = #tpu.pipeline_mode<synchronous>, transform_indices = @transform_1, window_bounds = array<i64: 128, 768>}, {pipeline_mode = #tpu.pipeline_mode<synchronous>, transform_indices = @transform_2, window_bounds = array<i64: 1, 640>}, {transform_indices = @transform_3, window_bounds = array<i64: 8, 256>}]} {
    %c0 = arith.constant 0 : index
    %c0_0 = arith.constant 0 : index
    %0 = vector.load %arg1[%c0, %c0_0] : memref<8x128xf32, #tpu.memory_space<vmem>>, vector<8x128xf32>
    %c0_1 = arith.constant 0 : index
    %c0_2 = arith.constant 0 : index
    %1 = vector.load %arg2[%c0_1, %c0_2] : memref<128x768xf32, #tpu.memory_space<vmem>>, vector<128x128xf32>
    %c0_3 = arith.constant 0 : index
    %c0_4 = arith.constant 0 : index
    %2 = vector.load %arg3[%c0_3, %c0_4] : memref<1x640xf32, #tpu.memory_space<vmem>>, vector<1x128xf32>
    %cst = arith.constant dense<0.000000e+00> : vector<8x128xf32>
    %3 = tpu.matmul %0, %1, %cst {dimension_numbers = #tpu.dot_dimension_numbers<[1], [0], [0], [1], [0, 0, 1, 1], [], []>} : vector<8x128xf32>, vector<128x128xf32>, vector<8x128xf32> -> vector<8x128xf32>
    %4 = vector.broadcast %2 : vector<1x128xf32> to vector<8x128xf32>
    %5 = arith.addf %3, %4 : vector<8x128xf32>
    %cst_5 = arith.constant 5.000000e-01 : f32
    %6 = vector.broadcast %cst_5 : f32 to vector<8x128xf32>
    %7 = arith.mulf %6, %5 : vector<8x128xf32>
    %cst_6 = arith.constant 0.707106769 : f32
    %8 = vector.broadcast %cst_6 : f32 to vector<8x128xf32>
    %9 = arith.mulf %5, %8 : vector<8x128xf32>
    %10 = math.erf %9 : vector<8x128xf32>
    %cst_7 = arith.constant 1.000000e+00 : f32
    %11 = vector.broadcast %cst_7 : f32 to vector<8x128xf32>
    %12 = arith.addf %11, %10 : vector<8x128xf32>
    %13 = arith.mulf %7, %12 : vector<8x128xf32>
    %c0_8 = arith.constant 0 : index
    %c128 = arith.constant 128 : index
    %14 = vector.load %arg2[%c0_8, %c128] : memref<128x768xf32, #tpu.memory_space<vmem>>, vector<128x128xf32>
    %cst_9 = arith.constant dense<0.000000e+00> : vector<8x128xf32>
    %15 = tpu.matmul %13, %14, %cst_9 {dimension_numbers = #tpu.dot_dimension_numbers<[1], [0], [0], [1], [0, 0, 1, 1], [], []>} : vector<8x128xf32>, vector<128x128xf32>, vector<8x128xf32> -> vector<8x128xf32>
    %16 = arith.mulf %13, %13 : vector<8x128xf32>
    %cst_10 = arith.constant dense<0.000000e+00> : vector<8x128xf32>
    %17 = tpu.matmul %16, %14, %cst_10 {dimension_numbers = #tpu.dot_dimension_numbers<[1], [0], [0], [1], [0, 0, 1, 1], [], []>} : vector<8x128xf32>, vector<128x128xf32>, vector<8x128xf32> -> vector<8x128xf32>
    %18 = arith.mulf %15, %15 : vector<8x128xf32>
    %19 = arith.subf %17, %18 : vector<8x128xf32>
    %cst_11 = arith.constant 0.000000e+00 : f32
    %20 = vector.broadcast %cst_11 : f32 to vector<8x128xf32>
    %21 = arith.maximumf %19, %20 : vector<8x128xf32>
    %22 = arith.subf %13, %15 : vector<8x128xf32>
    %cst_12 = arith.constant 9.99999974E-6 : f32
    %23 = vector.broadcast %cst_12 : f32 to vector<8x128xf32>
    %24 = arith.addf %21, %23 : vector<8x128xf32>
    %25 = math.rsqrt %24 : vector<8x128xf32>
    %26 = arith.mulf %22, %25 : vector<8x128xf32>
    %c0_13 = arith.constant 0 : index
    %c256 = arith.constant 256 : index
    %27 = vector.load %arg2[%c0_13, %c256] : memref<128x768xf32, #tpu.memory_space<vmem>>, vector<128x128xf32>
    %c0_14 = arith.constant 0 : index
    %c128_15 = arith.constant 128 : index
    %28 = vector.load %arg3[%c0_14, %c128_15] : memref<1x640xf32, #tpu.memory_space<vmem>>, vector<1x128xf32>
    %cst_16 = arith.constant dense<0.000000e+00> : vector<8x128xf32>
    %29 = tpu.matmul %26, %27, %cst_16 {dimension_numbers = #tpu.dot_dimension_numbers<[1], [0], [0], [1], [0, 0, 1, 1], [], []>} : vector<8x128xf32>, vector<128x128xf32>, vector<8x128xf32> -> vector<8x128xf32>
    %30 = vector.broadcast %28 : vector<1x128xf32> to vector<8x128xf32>
    %31 = arith.addf %29, %30 : vector<8x128xf32>
    %cst_17 = arith.constant 5.000000e-01 : f32
    %32 = vector.broadcast %cst_17 : f32 to vector<8x128xf32>
    %33 = arith.mulf %32, %31 : vector<8x128xf32>
    %cst_18 = arith.constant 0.707106769 : f32
    %34 = vector.broadcast %cst_18 : f32 to vector<8x128xf32>
    %35 = arith.mulf %31, %34 : vector<8x128xf32>
    %36 = math.erf %35 : vector<8x128xf32>
    %cst_19 = arith.constant 1.000000e+00 : f32
    %37 = vector.broadcast %cst_19 : f32 to vector<8x128xf32>
    %38 = arith.addf %37, %36 : vector<8x128xf32>
    %39 = arith.mulf %33, %38 : vector<8x128xf32>
    %c0_20 = arith.constant 0 : index
    %c384 = arith.constant 384 : index
    %40 = vector.load %arg2[%c0_20, %c384] : memref<128x768xf32, #tpu.memory_space<vmem>>, vector<128x128xf32>
    %cst_21 = arith.constant dense<0.000000e+00> : vector<8x128xf32>
    %41 = tpu.matmul %39, %40, %cst_21 {dimension_numbers = #tpu.dot_dimension_numbers<[1], [0], [0], [1], [0, 0, 1, 1], [], []>} : vector<8x128xf32>, vector<128x128xf32>, vector<8x128xf32> -> vector<8x128xf32>
    %42 = arith.mulf %39, %39 : vector<8x128xf32>
    %cst_22 = arith.constant dense<0.000000e+00> : vector<8x128xf32>
    %43 = tpu.matmul %42, %40, %cst_22 {dimension_numbers = #tpu.dot_dimension_numbers<[1], [0], [0], [1], [0, 0, 1, 1], [], []>} : vector<8x128xf32>, vector<128x128xf32>, vector<8x128xf32> -> vector<8x128xf32>
    %44 = arith.mulf %41, %41 : vector<8x128xf32>
    %45 = arith.subf %43, %44 : vector<8x128xf32>
    %cst_23 = arith.constant 0.000000e+00 : f32
    %46 = vector.broadcast %cst_23 : f32 to vector<8x128xf32>
    %47 = arith.maximumf %45, %46 : vector<8x128xf32>
    %48 = arith.subf %39, %41 : vector<8x128xf32>
    %cst_24 = arith.constant 9.99999974E-6 : f32
    %49 = vector.broadcast %cst_24 : f32 to vector<8x128xf32>
    %50 = arith.addf %47, %49 : vector<8x128xf32>
    %51 = math.rsqrt %50 : vector<8x128xf32>
    %52 = arith.mulf %48, %51 : vector<8x128xf32>
    %c0_25 = arith.constant 0 : index
    %c512 = arith.constant 512 : index
    %53 = vector.load %arg2[%c0_25, %c512] : memref<128x768xf32, #tpu.memory_space<vmem>>, vector<128x256xf32>
    %c0_26 = arith.constant 0 : index
    %c256_27 = arith.constant 256 : index
    %54 = vector.load %arg3[%c0_26, %c256_27] : memref<1x640xf32, #tpu.memory_space<vmem>>, vector<1x256xf32>
    %cst_28 = arith.constant dense<0.000000e+00> : vector<8x256xf32>
    %55 = tpu.matmul %52, %53, %cst_28 {dimension_numbers = #tpu.dot_dimension_numbers<[1], [0], [0], [1], [0, 0, 1, 1], [], []>} : vector<8x128xf32>, vector<128x256xf32>, vector<8x256xf32> -> vector<8x256xf32>
    %56 = vector.broadcast %54 : vector<1x256xf32> to vector<8x256xf32>
    %57 = arith.addf %55, %56 : vector<8x256xf32>
    %c0_29 = arith.constant 0 : index
    %c512_30 = arith.constant 512 : index
    %58 = vector.load %arg3[%c0_29, %c512_30] : memref<1x640xf32, #tpu.memory_space<vmem>>, vector<1x128xf32>
    %59 = vector.extract_strided_slice %57 {offsets = [0, 0], sizes = [8, 128], strides = [1, 1]} : vector<8x256xf32> to vector<8x128xf32>
    %60 = arith.negf %59 : vector<8x128xf32>
    %61 = math.exp %60 : vector<8x128xf32>
    %cst_31 = arith.constant 1.000000e+00 : f32
    %62 = vector.broadcast %cst_31 : f32 to vector<8x128xf32>
    %63 = arith.addf %62, %61 : vector<8x128xf32>
    %64 = arith.divf %62, %63 : vector<8x128xf32>
    %65 = vector.broadcast %58 : vector<1x128xf32> to vector<8x128xf32>
    %66 = arith.addf %64, %65 : vector<8x128xf32>
    %c0_32 = arith.constant 0 : index
    %c0_33 = arith.constant 0 : index
    %67 = vector.load %arg4[%c0_32, %c0_33] : memref<8x256xf32, #tpu.memory_space<vmem>>, vector<8x128xf32>
    tpu.vector_store %arg4[%c0_32, %c0_33], %66 {strides = array<i32>} : memref<8x256xf32, #tpu.memory_space<vmem>>, vector<8x128xf32>,
    %68 = vector.extract_strided_slice %57 {offsets = [0, 128], sizes = [8, 128], strides = [1, 1]} : vector<8x256xf32> to vector<8x128xf32>
    %cst_34 = arith.constant 5.000000e-01 : f32
    %69 = vector.broadcast %cst_34 : f32 to vector<8x128xf32>
    %70 = arith.mulf %69, %68 : vector<8x128xf32>
    %cst_35 = arith.constant 0.707106769 : f32
    %71 = vector.broadcast %cst_35 : f32 to vector<8x128xf32>
    %72 = arith.mulf %68, %71 : vector<8x128xf32>
    %73 = math.erf %72 : vector<8x128xf32>
    %cst_36 = arith.constant 1.000000e+00 : f32
    %74 = vector.broadcast %cst_36 : f32 to vector<8x128xf32>
    %75 = arith.addf %74, %73 : vector<8x128xf32>
    %76 = arith.mulf %70, %75 : vector<8x128xf32>
    %c0_37 = arith.constant 0 : index
    %c128_38 = arith.constant 128 : index
    %77 = vector.load %arg4[%c0_37, %c128_38] : memref<8x256xf32, #tpu.memory_space<vmem>>, vector<8x128xf32>
    tpu.vector_store %arg4[%c0_37, %c128_38], %76 {strides = array<i32>} : memref<8x256xf32, #tpu.memory_space<vmem>>, vector<8x128xf32>,
    return
  }
  func.func @transform_0(%arg0: i32) -> (i32, i32) {
    %c0_i32 = arith.constant 0 : i32
    %c0_i32_0 = arith.constant 0 : i32
    return %arg0, %c0_i32 : i32, i32
  }
  func.func @transform_1(%arg0: i32) -> (i32, i32) {
    %c0_i32 = arith.constant 0 : i32
    %c0_i32_0 = arith.constant 0 : i32
    %c0_i32_1 = arith.constant 0 : i32
    return %c0_i32, %c0_i32_0 : i32, i32
  }
  func.func @transform_2(%arg0: i32) -> (i32, i32) {
    %c0_i32 = arith.constant 0 : i32
    %c0_i32_0 = arith.constant 0 : i32
    %c0_i32_1 = arith.constant 0 : i32
    return %c0_i32, %c0_i32_0 : i32, i32
  }
  func.func @transform_3(%arg0: i32) -> (i32, i32) {
    %c0_i32 = arith.constant 0 : i32
    %c0_i32_0 = arith.constant 0 : i32
    return %arg0, %c0_i32 : i32, i32
  }
}

</mosaic_0001>

<llo_original>
// kernel: apply_fn.1
$region0: #{apply_fn.1}
  #allocation0 [shape = 'u32[]', space=smem, size = 0x4, offset = 0x4, fixed_abs, tag = 'smem constant byte address 0x4 - core index']
  #allocation1 [shape = 'u32[144,128]{1,0:T(1,128)}', space=vmem, size = 0x12000, scoped, tag = 'internal scratch']
  %s0 = inlined_call_operand.vmem [shape: f32[8,128], index: 0, kind: input, shape index: {}]
  %s1 = inlined_call_operand.hbm [shape: f32[128,768], index: 1, kind: input, shape index: {}]
  %s2 = inlined_call_operand.vmem [shape: f32[1,640], index: 2, kind: input, shape index: {}]
  %s3 = inlined_call_operand.vmem [shape: f32[8,256], index: 3, kind: output, shape index: {}]
  %s4 = sld [smem:[#allocation0]]
  $region26: #{apply_fn.1} parent=0
    _
  %s6 = ssub.s32 1, %s4
  %s7 = scalar_select 0, %s6, %s4
  $region1: #{apply_fn.1} parent=0
    #allocation2 [shape = 'u8[393216]{0}', space=vmem, size = 0x60000, scoped, tag = 'input window, operand 1, single buffered']
    #allocation3 [shape = 's32[1]{0}', space=sflag, size = 0x4, scoped, tag = 'scoped memory for apply_fn.1']
    %8 = vsyncpa [#allocation3], 0
    // Predicated region
    $region2: #{apply_fn.1} parent=1 // pred_check
      _
    $region3: #{apply_fn.1} parent=1 // pred_check_branch
      %10 = sbr.rel (0) target = $region5
    $region4: #{apply_fn.1} parent=1 // pred_region
      _
    $region5: #{apply_fn.1} parent=1 // pred_fallthru
      _
    // Predicated region
    $region6: #{apply_fn.1} parent=1 // pred_check
      _
    $region7: #{apply_fn.1} parent=1 // pred_check_branch
      %12 = sbr.rel (0) target = $region9
    $region8: #{apply_fn.1} parent=1 // pred_region
      %s14 = ssub.s32 12288, 12288
      %15 = vsyncadd [#allocation3], %s14
      %s16 = sshll.u32 [#allocation2], 4
      %s17 = int_to_ptr.vmem [resolvable:$true] %s16
      %22 = dma.hbm_to_vmem [thread:$0]  %s1, 12288, %s17, [#allocation3], 768, 768, 48
    $region9: #{apply_fn.1} parent=1 // pred_fallthru
      _
    // Predicated region
    $region10: #{apply_fn.1} parent=1 // pred_check
      _
    $region11: #{apply_fn.1} parent=1 // pred_check_branch
      %24 = sbr.rel (0) target = $region13
    $region12: #{apply_fn.1} parent=1 // pred_region
      _
    $region13: #{apply_fn.1} parent=1 // pred_fallthru
      _
    // Predicated region
    $region14: #{apply_fn.1} parent=1 // pred_check
      _
    $region15: #{apply_fn.1} parent=1 // pred_check_branch
      %26 = sbr.rel (0) target = $region17
    $region16: #{apply_fn.1} parent=1 // pred_region
      %27 = dma.done [#allocation3], 12288
    $region17: #{apply_fn.1} parent=1 // pred_fallthru
      _
    %v28 = vld [vmem:[%s0] sm:$0xff]
    %v29 = vld [vmem:[#allocation2] sm:$0xff]
    %v30 = vld [vmem:[#allocation2 + $0x30] sm:$0xff]
    %v31 = vld [vmem:[#allocation2 + $0x60] sm:$0xff]
    %v32 = vld [vmem:[#allocation2 + $0x90] sm:$0xff]
    %v33 = vld [vmem:[#allocation2 + $0xc0] sm:$0xff]
    %v34 = vld [vmem:[#allocation2 + $0xf0] sm:$0xff]
    %v35 = vld [vmem:[#allocation2 + $0x120] sm:$0xff]
    %v36 = vld [vmem:[#allocation2 + $0x150] sm:$0xff]
    %v37 = vld [vmem:[#allocation2 + $0x180] sm:$0xff]
    %v38 = vld [vmem:[#allocation2 + $0x1b0] sm:$0xff]
    %v39 = vld [vmem:[#allocation2 + $0x1e0] sm:$0xff]
    %v40 = vld [vmem:[#allocation2 + $0x210] sm:$0xff]
    %v41 = vld [vmem:[#allocation2 + $0x240] sm:$0xff]
    %v42 = vld [vmem:[#allocation2 + $0x270] sm:$0xff]
    %v43 = vld [vmem:[#allocation2 + $0x2a0] sm:$0xff]
    %v44 = vld [vmem:[#allocation2 + $0x2d0] sm:$0xff]
    %v45 = vld [vmem:[%s2] sm:$0x1]
    %v47 = vlaneseq
    %v48 = vshrl.u32 %v47, 7
    %v49 = vsub.s32 0, %v48
    %v50 = vrot.slane %v45, %v49
    %52 = vmatprep.subr.mxu0 0.0
    %53 = vmatpush1.msra.mxu0 %v29
    %54 = vmatprep.subr.mxu0 0.0
    %55 = vmatpush1.msra.mxu0 %v30
    %56 = vmatprep.subr.mxu0 0.0
    %57 = vmatpush1.msra.mxu0 %v31
    %58 = vmatprep.subr.mxu0 0.0
    %59 = vmatpush1.msra.mxu0 %v32
    %60 = vmatprep.subr.mxu0 0.0
    %61 = vmatpush1.msra.mxu0 %v33
    %62 = vmatprep.subr.mxu0 0.0
    %63 = vmatpush1.msra.mxu0 %v34
    %64 = vmatprep.subr.mxu0 0.0
    %65 = vmatpush1.msra.mxu0 %v35
    %66 = vmatprep.subr.mxu0 0.0
    %67 = vmatpush1.msra.mxu0 %v36
    %68 = vmatprep.subr.mxu0 0.0
    %69 = vmatpush1.msra.mxu0 %v37
    %70 = vmatprep.subr.mxu0 0.0
    %71 = vmatpush1.msra.mxu0 %v38
    %72 = vmatprep.subr.mxu0 0.0
    %73 = vmatpush1.msra.mxu0 %v39
    %74 = vmatprep.subr.mxu0 0.0
    %75 = vmatpush1.msra.mxu0 %v40
    %76 = vmatprep.subr.mxu0 0.0
    %77 = vmatpush1.msra.mxu0 %v41
    %78 = vmatprep.subr.mxu0 0.0
    %79 = vmatpush1.msra.mxu0 %v42
    %80 = vmatprep.subr.mxu0 0.0
    %81 = vmatpush1.msra.mxu0 %v43
    %82 = vmatprep.subr.mxu0 0.0
    %83 = vmatpush1.msra.mxu0 %v44
    %84 = vmatprep.subr.mxu0 0.0
    %85 = vmatpush1.msra.mxu0 0.0
    %86 = vmatprep.subr.mxu0 0.0
    %87 = vmatpush1.msra.mxu0 0.0
    %88 = vmatprep.subr.mxu0 0.0
    %89 = vmatpush1.msra.mxu0 0.0
    %90 = vmatprep.subr.mxu0 0.0
    %91 = vmatpush1.msra.mxu0 0.0
    %92 = vmatprep.subr.mxu0 0.0
    %93 = vmatpush1.msra.mxu0 0.0
    %94 = vmatprep.subr.mxu0 0.0
    %95 = vmatpush1.msra.mxu0 0.0
    %96 = vmatprep.subr.mxu0 0.0
    %97 = vmatpush1.msra.mxu0 0.0
    %98 = vmatprep.subr.mxu0 0.0
    %99 = vmatpush1.msra.mxu0 0.0
    %100 = vmatprep.subr.mxu0 0.0
    %101 = vmatpush1.msra.mxu0 0.0
    %102 = vmatprep.subr.mxu0 0.0
    %103 = vmatpush1.msra.mxu0 0.0
    %104 = vmatprep.subr.mxu0 0.0
    %105 = vmatpush1.msra.mxu0 0.0
    %106 = vmatprep.subr.mxu0 0.0
    %107 = vmatpush1.msra.mxu0 0.0
    %108 = vmatprep.subr.mxu0 0.0
    %109 = vmatpush1.msra.mxu0 0.0
    %110 = vmatprep.subr.mxu0 0.0
    %111 = vmatpush1.msra.mxu0 0.0
    %112 = vmatprep.subr.mxu0 0.0
    %113 = vmatpush1.msra.mxu0 0.0
    %114 = vmatprep.subr.mxu0 0.0
    %115 = vmatpush1.msra.mxu0 0.0
    %116 = vmatprep.mubr.f32.mxu0 0.0
    %117 = vmatmul.mubr.f32.gmra.mrb[0].mxu0 %v28
    %v118 = vpop.f32.mrb[0].mxu0
    %v119 = vadd.f32 %v50, %v118
    %v120 = vpop.f32.mrb[0].mxu0
    %121 = vdwg.mxu0
    %v122 = vmul.f32 %v119, 0.5
    %v123 = vmul.f32 %v119, 0.70710677
    %v124 = verf.f32.pop %v123
    %v125 = vadd.f32 %v124, 1.0
    %v126 = vmul.f32 %v122, %v125
    %v127 = vld [vmem:[#allocation2 + $0x8] sm:$0xff]
    %v128 = vld [vmem:[#allocation2 + $0x38] sm:$0xff]
    %v129 = vld [vmem:[#allocation2 + $0x68] sm:$0xff]
    %v130 = vld [vmem:[#allocation2 + $0x98] sm:$0xff]
    %v131 = vld [vmem:[#allocation2 + $0xc8] sm:$0xff]
    %v132 = vld [vmem:[#allocation2 + $0xf8] sm:$0xff]
    %v133 = vld [vmem:[#allocation2 + $0x128] sm:$0xff]
    %v134 = vld [vmem:[#allocation2 + $0x158] sm:$0xff]
    %v135 = vld [vmem:[#allocation2 + $0x188] sm:$0xff]
    %v136 = vld [vmem:[#allocation2 + $0x1b8] sm:$0xff]
    %v137 = vld [vmem:[#allocation2 + $0x1e8] sm:$0xff]
    %v138 = vld [vmem:[#allocation2 + $0x218] sm:$0xff]
    %v139 = vld [vmem:[#allocation2 + $0x248] sm:$0xff]
    %v140 = vld [vmem:[#allocation2 + $0x278] sm:$0xff]
    %v141 = vld [vmem:[#allocation2 + $0x2a8] sm:$0xff]
    %v142 = vld [vmem:[#allocation2 + $0x2d8] sm:$0xff]
    %143 = vmatprep.subr.mxu0 0.0
    %144 = vmatpush1.msra.mxu0 %v127
    %145 = vmatprep.subr.mxu0 0.0
    %146 = vmatpush1.msra.mxu0 %v128
    %147 = vmatprep.subr.mxu0 0.0
    %148 = vmatpush1.msra.mxu0 %v129
    %149 = vmatprep.subr.mxu0 0.0
    %150 = vmatpush1.msra.mxu0 %v130
    %151 = vmatprep.subr.mxu0 0.0
    %152 = vmatpush1.msra.mxu0 %v131
    %153 = vmatprep.subr.mxu0 0.0
    %154 = vmatpush1.msra.mxu0 %v132
    %155 = vmatprep.subr.mxu0 0.0
    %156 = vmatpush1.msra.mxu0 %v133
    %157 = vmatprep.subr.mxu0 0.0
    %158 = vmatpush1.msra.mxu0 %v134
    %159 = vmatprep.subr.mxu0 0.0
    %160 = vmatpush1.msra.mxu0 %v135
    %161 = vmatprep.subr.mxu0 0.0
    %162 = vmatpush1.msra.mxu0 %v136
    %163 = vmatprep.subr.mxu0 0.0
    %164 = vmatpush1.msra.mxu0 %v137
    %165 = vmatprep.subr.mxu0 0.0
    %166 = vmatpush1.msra.mxu0 %v138
    %167 = vmatprep.subr.mxu0 0.0
    %168 = vmatpush1.msra.mxu0 %v139
    %169 = vmatprep.subr.mxu0 0.0
    %170 = vmatpush1.msra.mxu0 %v140
    %171 = vmatprep.subr.mxu0 0.0
    %172 = vmatpush1.msra.mxu0 %v141
    %173 = vmatprep.subr.mxu0 0.0
    %174 = vmatpush1.msra.mxu0 %v142
    %175 = vmatprep.subr.mxu0 0.0
    %176 = vmatpush1.msra.mxu0 0.0
    %177 = vmatprep.subr.mxu0 0.0
    %178 = vmatpush1.msra.mxu0 0.0
    %179 = vmatprep.subr.mxu0 0.0
    %180 = vmatpush1.msra.mxu0 0.0
    %181 = vmatprep.subr.mxu0 0.0
    %182 = vmatpush1.msra.mxu0 0.0
    %183 = vmatprep.subr.mxu0 0.0
    %184 = vmatpush1.msra.mxu0 0.0
    %185 = vmatprep.subr.mxu0 0.0
    %186 = vmatpush1.msra.mxu0 0.0
    %187 = vmatprep.subr.mxu0 0.0
    %188 = vmatpush1.msra.mxu0 0.0
    %189 = vmatprep.subr.mxu0 0.0
    %190 = vmatpush1.msra.mxu0 0.0
    %191 = vmatprep.subr.mxu0 0.0
    %192 = vmatpush1.msra.mxu0 0.0
    %193 = vmatprep.subr.mxu0 0.0
    %194 = vmatpush1.msra.mxu0 0.0
    %195 = vmatprep.subr.mxu0 0.0
    %196 = vmatpush1.msra.mxu0 0.0
    %197 = vmatprep.subr.mxu0 0.0
    %198 = vmatpush1.msra.mxu0 0.0
    %199 = vmatprep.subr.mxu0 0.0
    %200 = vmatpush1.msra.mxu0 0.0
    %201 = vmatprep.subr.mxu0 0.0
    %202 = vmatpush1.msra.mxu0 0.0
    %203 = vmatprep.subr.mxu0 0.0
    %204 = vmatpush1.msra.mxu0 0.0
    %205 = vmatprep.subr.mxu0 0.0
    %206 = vmatpush1.msra.mxu0 0.0
    %207 = vmatprep.mubr.f32.mxu0 0.0
    %208 = vmatmul.mubr.f32.gmra.mrb[0].mxu0 %v126
    %v209 = vpop.f32.mrb[0].mxu0
    %v210 = vadd.f32 0.0, %v209
    %v211 = vpop.f32.mrb[0].mxu0
    %212 = vdwg.mxu0
    %v213 = vmul.f32 %v126, %v126
    %214 = vmatprep.subr.mxu0 0.0
    %215 = vmatpush1.msra.mxu0 %v127
    %216 = vmatprep.subr.mxu0 0.0
    %217 = vmatpush1.msra.mxu0 %v128
    %218 = vmatprep.subr.mxu0 0.0
    %219 = vmatpush1.msra.mxu0 %v129
    %220 = vmatprep.subr.mxu0 0.0
    %221 = vmatpush1.msra.mxu0 %v130
    %222 = vmatprep.subr.mxu0 0.0
    %223 = vmatpush1.msra.mxu0 %v131
    %224 = vmatprep.subr.mxu0 0.0
    %225 = vmatpush1.msra.mxu0 %v132
    %226 = vmatprep.subr.mxu0 0.0
    %227 = vmatpush1.msra.mxu0 %v133
    %228 = vmatprep.subr.mxu0 0.0
    %229 = vmatpush1.msra.mxu0 %v134
    %230 = vmatprep.subr.mxu0 0.0
    %231 = vmatpush1.msra.mxu0 %v135
    %232 = vmatprep.subr.mxu0 0.0
    %233 = vmatpush1.msra.mxu0 %v136
    %234 = vmatprep.subr.mxu0 0.0
    %235 = vmatpush1.msra.mxu0 %v137
    %236 = vmatprep.subr.mxu0 0.0
    %237 = vmatpush1.msra.mxu0 %v138
    %238 = vmatprep.subr.mxu0 0.0
    %239 = vmatpush1.msra.mxu0 %v139
    %240 = vmatprep.subr.mxu0 0.0
    %241 = vmatpush1.msra.mxu0 %v140
    %242 = vmatprep.subr.mxu0 0.0
    %243 = vmatpush1.msra.mxu0 %v141
    %244 = vmatprep.subr.mxu0 0.0
    %245 = vmatpush1.msra.mxu0 %v142
    %246 = vmatprep.subr.mxu0 0.0
    %247 = vmatpush1.msra.mxu0 0.0
    %248 = vmatprep.subr.mxu0 0.0
    %249 = vmatpush1.msra.mxu0 0.0
    %250 = vmatprep.subr.mxu0 0.0
    %251 = vmatpush1.msra.mxu0 0.0
    %252 = vmatprep.subr.mxu0 0.0
    %253 = vmatpush1.msra.mxu0 0.0
    %254 = vmatprep.subr.mxu0 0.0
    %255 = vmatpush1.msra.mxu0 0.0
    %256 = vmatprep.subr.mxu0 0.0
    %257 = vmatpush1.msra.mxu0 0.0
    %258 = vmatprep.subr.mxu0 0.0
    %259 = vmatpush1.msra.mxu0 0.0
    %260 = vmatprep.subr.mxu0 0.0
    %261 = vmatpush1.msra.mxu0 0.0
    %262 = vmatprep.subr.mxu0 0.0
    %263 = vmatpush1.msra.mxu0 0.0
    %264 = vmatprep.subr.mxu0 0.0
    %265 = vmatpush1.msra.mxu0 0.0
    %266 = vmatprep.subr.mxu0 0.0
    %267 = vmatpush1.msra.mxu0 0.0
    %268 = vmatprep.subr.mxu0 0.0
    %269 = vmatpush1.msra.mxu0 0.0
    %270 = vmatprep.subr.mxu0 0.0
    %271 = vmatpush1.msra.mxu0 0.0
    %272 = vmatprep.subr.mxu0 0.0
    %273 = vmatpush1.msra.mxu0 0.0
    %274 = vmatprep.subr.mxu0 0.0
    %275 = vmatpush1.msra.mxu0 0.0
    %276 = vmatprep.subr.mxu0 0.0
    %277 = vmatpush1.msra.mxu0 0.0
    %278 = vmatprep.mubr.f32.mxu0 0.0
    %279 = vmatmul.mubr.f32.gmra.mrb[0].mxu0 %v213
    %v280 = vpop.f32.mrb[0].mxu0
    %v281 = vadd.f32 0.0, %v280
    %v282 = vpop.f32.mrb[0].mxu0
    %283 = vdwg.mxu0
    %v284 = vmul.f32 %v210, %v210
    %v285 = vsub.f32 %v281, %v284
    %v286 = vmax.f32 %v285, 0.0
    %v287 = vsub.f32 %v126, %v210
    %v288 = vadd.f32 %v286, 1e-05
    %v289 = vrsqrt.pop %v288
    %v290 = vmul.f32 %v287, %v289
    %v291 = vld [vmem:[#allocation2 + $0x10] sm:$0xff]
    %v292 = vld [vmem:[#allocation2 + $0x40] sm:$0xff]
    %v293 = vld [vmem:[#allocation2 + $0x70] sm:$0xff]
    %v294 = vld [vmem:[#allocation2 + $0xa0] sm:$0xff]
    %v295 = vld [vmem:[#allocation2 + $0xd0] sm:$0xff]
    %v296 = vld [vmem:[#allocation2 + $0x100] sm:$0xff]
    %v297 = vld [vmem:[#allocation2 + $0x130] sm:$0xff]
    %v298 = vld [vmem:[#allocation2 + $0x160] sm:$0xff]
    %v299 = vld [vmem:[#allocation2 + $0x190] sm:$0xff]
    %v300 = vld [vmem:[#allocation2 + $0x1c0] sm:$0xff]
    %v301 = vld [vmem:[#allocation2 + $0x1f0] sm:$0xff]
    %v302 = vld [vmem:[#allocation2 + $0x220] sm:$0xff]
    %v303 = vld [vmem:[#allocation2 + $0x250] sm:$0xff]
    %v304 = vld [vmem:[#allocation2 + $0x280] sm:$0xff]
    %v305 = vld [vmem:[#allocation2 + $0x2b0] sm:$0xff]
    %v306 = vld [vmem:[#allocation2 + $0x2e0] sm:$0xff]
    %v307 = vld [vmem:[%s2 + $0x1] sm:$0x1]
    %v309 = vlaneseq
    %v310 = vshrl.u32 %v309, 7
    %v311 = vsub.s32 0, %v310
    %v312 = vrot.slane %v307, %v311
    %314 = vmatprep.subr.mxu0 0.0
    %315 = vmatpush1.msra.mxu0 %v291
    %316 = vmatprep.subr.mxu0 0.0
    %317 = vmatpush1.msra.mxu0 %v292
    %318 = vmatprep.subr.mxu0 0.0
    %319 = vmatpush1.msra.mxu0 %v293
    %320 = vmatprep.subr.mxu0 0.0
    %321 = vmatpush1.msra.mxu0 %v294
    %322 = vmatprep.subr.mxu0 0.0
    %323 = vmatpush1.msra.mxu0 %v295
    %324 = vmatprep.subr.mxu0 0.0
    %325 = vmatpush1.msra.mxu0 %v296
    %326 = vmatprep.subr.mxu0 0.0
    %327 = vmatpush1.msra.mxu0 %v297
    %328 = vmatprep.subr.mxu0 0.0
    %329 = vmatpush1.msra.mxu0 %v298
    %330 = vmatprep.subr.mxu0 0.0
    %331 = vmatpush1.msra.mxu0 %v299
    %332 = vmatprep.subr.mxu0 0.0
    %333 = vmatpush1.msra.mxu0 %v300
    %334 = vmatprep.subr.mxu0 0.0
    %335 = vmatpush1.msra.mxu0 %v301
    %336 = vmatprep.subr.mxu0 0.0
    %337 = vmatpush1.msra.mxu0 %v302
    %338 = vmatprep.subr.mxu0 0.0
    %339 = vmatpush1.msra.mxu0 %v303
    %340 = vmatprep.subr.mxu0 0.0
    %341 = vmatpush1.msra.mxu0 %v304
    %342 = vmatprep.subr.mxu0 0.0
    %343 = vmatpush1.msra.mxu0 %v305
    %344 = vmatprep.subr.mxu0 0.0
    %345 = vmatpush1.msra.mxu0 %v306
    %346 = vmatprep.subr.mxu0 0.0
    %347 = vmatpush1.msra.mxu0 0.0
    %348 = vmatprep.subr.mxu0 0.0
    %349 = vmatpush1.msra.mxu0 0.0
    %350 = vmatprep.subr.mxu0 0.0
    %351 = vmatpush1.msra.mxu0 0.0
    %352 = vmatprep.subr.mxu0 0.0
    %353 = vmatpush1.msra.mxu0 0.0
    %354 = vmatprep.subr.mxu0 0.0
    %355 = vmatpush1.msra.mxu0 0.0
    %356 = vmatprep.subr.mxu0 0.0
    %357 = vmatpush1.msra.mxu0 0.0
    %358 = vmatprep.subr.mxu0 0.0
    %359 = vmatpush1.msra.mxu0 0.0
    %360 = vmatprep.subr.mxu0 0.0
    %361 = vmatpush1.msra.mxu0 0.0
    %362 = vmatprep.subr.mxu0 0.0
    %363 = vmatpush1.msra.mxu0 0.0
    %364 = vmatprep.subr.mxu0 0.0
    %365 = vmatpush1.msra.mxu0 0.0
    %366 = vmatprep.subr.mxu0 0.0
    %367 = vmatpush1.msra.mxu0 0.0
    %368 = vmatprep.subr.mxu0 0.0
    %369 = vmatpush1.msra.mxu0 0.0
    %370 = vmatprep.subr.mxu0 0.0
    %371 = vmatpush1.msra.mxu0 0.0
    %372 = vmatprep.subr.mxu0 0.0
    %373 = vmatpush1.msra.mxu0 0.0
    %374 = vmatprep.subr.mxu0 0.0
    %375 = vmatpush1.msra.mxu0 0.0
    %376 = vmatprep.subr.mxu0 0.0
    %377 = vmatpush1.msra.mxu0 0.0
    %378 = vmatprep.mubr.f32.mxu0 0.0
    %379 = vmatmul.mubr.f32.gmra.mrb[0].mxu0 %v290
    %v380 = vpop.f32.mrb[0].mxu0
    %v381 = vadd.f32 %v312, %v380
    %v382 = vpop.f32.mrb[0].mxu0
    %383 = vdwg.mxu0
    %v384 = vmul.f32 %v381, 0.5
    %v385 = vmul.f32 %v381, 0.70710677
    %v386 = verf.f32.pop %v385
    %v387 = vadd.f32 %v386, 1.0
    %v388 = vmul.f32 %v384, %v387
    %v389 = vld [vmem:[#allocation2 + $0x18] sm:$0xff]
    %v390 = vld [vmem:[#allocation2 + $0x48] sm:$0xff]
    %v391 = vld [vmem:[#allocation2 + $0x78] sm:$0xff]
    %v392 = vld [vmem:[#allocation2 + $0xa8] sm:$0xff]
    %v393 = vld [vmem:[#allocation2 + $0xd8] sm:$0xff]
    %v394 = vld [vmem:[#allocation2 + $0x108] sm:$0xff]
    %v395 = vld [vmem:[#allocation2 + $0x138] sm:$0xff]
    %v396 = vld [vmem:[#allocation2 + $0x168] sm:$0xff]
    %v397 = vld [vmem:[#allocation2 + $0x198] sm:$0xff]
    %v398 = vld [vmem:[#allocation2 + $0x1c8] sm:$0xff]
    %v399 = vld [vmem:[#allocation2 + $0x1f8] sm:$0xff]
    %v400 = vld [vmem:[#allocation2 + $0x228] sm:$0xff]
    %v401 = vld [vmem:[#allocation2 + $0x258] sm:$0xff]
    %v402 = vld [vmem:[#allocation2 + $0x288] sm:$0xff]
    %v403 = vld [vmem:[#allocation2 + $0x2b8] sm:$0xff]
    %v404 = vld [vmem:[#allocation2 + $0x2e8] sm:$0xff]
    %405 = vmatprep.subr.mxu0 0.0
    %406 = vmatpush1.msra.mxu0 %v389
    %407 = vmatprep.subr.mxu0 0.0
    %408 = vmatpush1.msra.mxu0 %v390
    %409 = vmatprep.subr.mxu0 0.0
    %410 = vmatpush1.msra.mxu0 %v391
    %411 = vmatprep.subr.mxu0 0.0
    %412 = vmatpush1.msra.mxu0 %v392
    %413 = vmatprep.subr.mxu0 0.0
    %414 = vmatpush1.msra.mxu0 %v393
    %415 = vmatprep.subr.mxu0 0.0
    %416 = vmatpush1.msra.mxu0 %v394
    %417 = vmatprep.subr.mxu0 0.0
    %418 = vmatpush1.msra.mxu0 %v395
    %419 = vmatprep.subr.mxu0 0.0
    %420 = vmatpush1.msra.mxu0 %v396
    %421 = vmatprep.subr.mxu0 0.0
    %422 = vmatpush1.msra.mxu0 %v397
    %423 = vmatprep.subr.mxu0 0.0
    %424 = vmatpush1.msra.mxu0 %v398
    %425 = vmatprep.subr.mxu0 0.0
    %426 = vmatpush1.msra.mxu0 %v399
    %427 = vmatprep.subr.mxu0 0.0
    %428 = vmatpush1.msra.mxu0 %v400
    %429 = vmatprep.subr.mxu0 0.0
    %430 = vmatpush1.msra.mxu0 %v401
    %431 = vmatprep.subr.mxu0 0.0
    %432 = vmatpush1.msra.mxu0 %v402
    %433 = vmatprep.subr.mxu0 0.0
    %434 = vmatpush1.msra.mxu0 %v403
    %435 = vmatprep.subr.mxu0 0.0
    %436 = vmatpush1.msra.mxu0 %v404
    %437 = vmatprep.subr.mxu0 0.0
    %438 = vmatpush1.msra.mxu0 0.0
    %439 = vmatprep.subr.mxu0 0.0
    %440 = vmatpush1.msra.mxu0 0.0
    %441 = vmatprep.subr.mxu0 0.0
    %442 = vmatpush1.msra.mxu0 0.0
    %443 = vmatprep.subr.mxu0 0.0
    %444 = vmatpush1.msra.mxu0 0.0
    %445 = vmatprep.subr.mxu0 0.0
    %446 = vmatpush1.msra.mxu0 0.0
    %447 = vmatprep.subr.mxu0 0.0
    %448 = vmatpush1.msra.mxu0 0.0
    %449 = vmatprep.subr.mxu0 0.0
    %450 = vmatpush1.msra.mxu0 0.0
    %451 = vmatprep.subr.mxu0 0.0
    %452 = vmatpush1.msra.mxu0 0.0
    %453 = vmatprep.subr.mxu0 0.0
    %454 = vmatpush1.msra.mxu0 0.0
    %455 = vmatprep.subr.mxu0 0.0
    %456 = vmatpush1.msra.mxu0 0.0
    %457 = vmatprep.subr.mxu0 0.0
    %458 = vmatpush1.msra.mxu0 0.0
    %459 = vmatprep.subr.mxu0 0.0
    %460 = vmatpush1.msra.mxu0 0.0
    %461 = vmatprep.subr.mxu0 0.0
    %462 = vmatpush1.msra.mxu0 0.0
    %463 = vmatprep.subr.mxu0 0.0
    %464 = vmatpush1.msra.mxu0 0.0
    %465 = vmatprep.subr.mxu0 0.0
    %466 = vmatpush1.msra.mxu0 0.0
    %467 = vmatprep.subr.mxu0 0.0
    %468 = vmatpush1.msra.mxu0 0.0
    %469 = vmatprep.mubr.f32.mxu0 0.0
    %470 = vmatmul.mubr.f32.gmra.mrb[0].mxu0 %v388
    %v471 = vpop.f32.mrb[0].mxu0
    %v472 = vadd.f32 0.0, %v471
    %v473 = vpop.f32.mrb[0].mxu0
    %474 = vdwg.mxu0
    %v475 = vmul.f32 %v388, %v388
    %476 = vmatprep.subr.mxu0 0.0
    %477 = vmatpush1.msra.mxu0 %v389
    %478 = vmatprep.subr.mxu0 0.0
    %479 = vmatpush1.msra.mxu0 %v390
    %480 = vmatprep.subr.mxu0 0.0
    %481 = vmatpush1.msra.mxu0 %v391
    %482 = vmatprep.subr.mxu0 0.0
    %483 = vmatpush1.msra.mxu0 %v392
    %484 = vmatprep.subr.mxu0 0.0
    %485 = vmatpush1.msra.mxu0 %v393
    %486 = vmatprep.subr.mxu0 0.0
    %487 = vmatpush1.msra.mxu0 %v394
    %488 = vmatprep.subr.mxu0 0.0
    %489 = vmatpush1.msra.mxu0 %v395
    %490 = vmatprep.subr.mxu0 0.0
    %491 = vmatpush1.msra.mxu0 %v396
    %492 = vmatprep.subr.mxu0 0.0
    %493 = vmatpush1.msra.mxu0 %v397
    %494 = vmatprep.subr.mxu0 0.0
    %495 = vmatpush1.msra.mxu0 %v398
    %496 = vmatprep.subr.mxu0 0.0
    %497 = vmatpush1.msra.mxu0 %v399
    %498 = vmatprep.subr.mxu0 0.0
    %499 = vmatpush1.msra.mxu0 %v400
    %500 = vmatprep.subr.mxu0 0.0
    %501 = vmatpush1.msra.mxu0 %v401
    %502 = vmatprep.subr.mxu0 0.0
    %503 = vmatpush1.msra.mxu0 %v402
    %504 = vmatprep.subr.mxu0 0.0
    %505 = vmatpush1.msra.mxu0 %v403
    %506 = vmatprep.subr.mxu0 0.0
    %507 = vmatpush1.msra.mxu0 %v404
    %508 = vmatprep.subr.mxu0 0.0
    %509 = vmatpush1.msra.mxu0 0.0
    %510 = vmatprep.subr.mxu0 0.0
    %511 = vmatpush1.msra.mxu0 0.0
    %512 = vmatprep.subr.mxu0 0.0
    %513 = vmatpush1.msra.mxu0 0.0
    %514 = vmatprep.subr.mxu0 0.0
    %515 = vmatpush1.msra.mxu0 0.0
    %516 = vmatprep.subr.mxu0 0.0
    %517 = vmatpush1.msra.mxu0 0.0
    %518 = vmatprep.subr.mxu0 0.0
    %519 = vmatpush1.msra.mxu0 0.0
    %520 = vmatprep.subr.mxu0 0.0
    %521 = vmatpush1.msra.mxu0 0.0
    %522 = vmatprep.subr.mxu0 0.0
    %523 = vmatpush1.msra.mxu0 0.0
    %524 = vmatprep.subr.mxu0 0.0
    %525 = vmatpush1.msra.mxu0 0.0
    %526 = vmatprep.subr.mxu0 0.0
    %527 = vmatpush1.msra.mxu0 0.0
    %528 = vmatprep.subr.mxu0 0.0
    %529 = vmatpush1.msra.mxu0 0.0
    %530 = vmatprep.subr.mxu0 0.0
    %531 = vmatpush1.msra.mxu0 0.0
    %532 = vmatprep.subr.mxu0 0.0
    %533 = vmatpush1.msra.mxu0 0.0
    %534 = vmatprep.subr.mxu0 0.0
    %535 = vmatpush1.msra.mxu0 0.0
    %536 = vmatprep.subr.mxu0 0.0
    %537 = vmatpush1.msra.mxu0 0.0
    %538 = vmatprep.subr.mxu0 0.0
    %539 = vmatpush1.msra.mxu0 0.0
    %540 = vmatprep.mubr.f32.mxu0 0.0
    %541 = vmatmul.mubr.f32.gmra.mrb[0].mxu0 %v475
    %v542 = vpop.f32.mrb[0].mxu0
    %v543 = vadd.f32 0.0, %v542
    %v544 = vpop.f32.mrb[0].mxu0
    %545 = vdwg.mxu0
    %v546 = vmul.f32 %v472, %v472
    %v547 = vsub.f32 %v543, %v546
    %v548 = vmax.f32 %v547, 0.0
    %v549 = vsub.f32 %v388, %v472
    %v550 = vadd.f32 %v548, 1e-05
    %v551 = vrsqrt.pop %v550
    %v552 = vmul.f32 %v549, %v551
    %v553 = vld [vmem:[#allocation2 + $0x20] sm:$0xff]
    %v554 = vld [vmem:[#allocation2 + $0x28] sm:$0xff]
    %v555 = vld [vmem:[#allocation2 + $0x50] sm:$0xff]
    %v556 = vld [vmem:[#allocation2 + $0x58] sm:$0xff]
    %v557 = vld [vmem:[#allocation2 + $0x80] sm:$0xff]
    %v558 = vld [vmem:[#allocation2 + $0x88] sm:$0xff]
    %v559 = vld [vmem:[#allocation2 + $0xb0] sm:$0xff]
    %v560 = vld [vmem:[#allocation2 + $0xb8] sm:$0xff]
    %v561 = vld [vmem:[#allocation2 + $0xe0] sm:$0xff]
    %v562 = vld [vmem:[#allocation2 + $0xe8] sm:$0xff]
    %v563 = vld [vmem:[#allocation2 + $0x110] sm:$0xff]
    %v564 = vld [vmem:[#allocation2 + $0x118] sm:$0xff]
    %v565 = vld [vmem:[#allocation2 + $0x140] sm:$0xff]
    %v566 = vld [vmem:[#allocation2 + $0x148] sm:$0xff]
    %v567 = vld [vmem:[#allocation2 + $0x170] sm:$0xff]
    %v568 = vld [vmem:[#allocation2 + $0x178] sm:$0xff]
    %v569 = vld [vmem:[#allocation2 + $0x1a0] sm:$0xff]
    %v570 = vld [vmem:[#allocation2 + $0x1a8] sm:$0xff]
    %v571 = vld [vmem:[#allocation2 + $0x1d0] sm:$0xff]
    %v572 = vld [vmem:[#allocation2 + $0x1d8] sm:$0xff]
    %v573 = vld [vmem:[#allocation2 + $0x200] sm:$0xff]
    %v574 = vld [vmem:[#allocation2 + $0x208] sm:$0xff]
    %v575 = vld [vmem:[#allocation2 + $0x230] sm:$0xff]
    %v576 = vld [vmem:[#allocation2 + $0x238] sm:$0xff]
    %v577 = vld [vmem:[#allocation2 + $0x260] sm:$0xff]
    %v578 = vld [vmem:[#allocation2 + $0x268] sm:$0xff]
    %v579 = vld [vmem:[#allocation2 + $0x290] sm:$0xff]
    %v580 = vld [vmem:[#allocation2 + $0x298] sm:$0xff]
    %v581 = vld [vmem:[#allocation2 + $0x2c0] sm:$0xff]
    %v582 = vld [vmem:[#allocation2 + $0x2c8] sm:$0xff]
    %v583 = vld [vmem:[#allocation2 + $0x2f0] sm:$0xff]
    %v584 = vld [vmem:[#allocation2 + $0x2f8] sm:$0xff]
    %v585 = vld [vmem:[%s2 + $0x2] sm:$0x3]
    %v587 = vlaneseq
    %v588 = vshrl.u32 %v587, 7
    %v589 = vsub.s32 0, %v588
    %v590 = vrot.slane %v585, %v589
    %v591 = vlaneseq
    %v592 = vshrl.u32 %v591, 7
    %v593 = vsub.s32 1, %v592
    %v594 = vrot.slane %v585, %v593
    %597 = vmatprep.subr.mxu0 %v554
    %598 = vmatpush1.msra.mxu0 %v553
    %599 = vmatprep.subr.mxu0 %v556
    %600 = vmatpush1.msra.mxu0 %v555
    %601 = vmatprep.subr.mxu0 %v558
    %602 = vmatpush1.msra.mxu0 %v557
    %603 = vmatprep.subr.mxu0 %v560
    %604 = vmatpush1.msra.mxu0 %v559
    %605 = vmatprep.subr.mxu0 %v562
    %606 = vmatpush1.msra.mxu0 %v561
    %607 = vmatprep.subr.mxu0 %v564
    %608 = vmatpush1.msra.mxu0 %v563
    %609 = vmatprep.subr.mxu0 %v566
    %610 = vmatpush1.msra.mxu0 %v565
    %611 = vmatprep.subr.mxu0 %v568
    %612 = vmatpush1.msra.mxu0 %v567
    %613 = vmatprep.subr.mxu0 %v570
    %614 = vmatpush1.msra.mxu0 %v569
    %615 = vmatprep.subr.mxu0 %v572
    %616 = vmatpush1.msra.mxu0 %v571
    %617 = vmatprep.subr.mxu0 %v574
    %618 = vmatpush1.msra.mxu0 %v573
    %619 = vmatprep.subr.mxu0 %v576
    %620 = vmatpush1.msra.mxu0 %v575
    %621 = vmatprep.subr.mxu0 %v578
    %622 = vmatpush1.msra.mxu0 %v577
    %623 = vmatprep.subr.mxu0 %v580
    %624 = vmatpush1.msra.mxu0 %v579
    %625 = vmatprep.subr.mxu0 %v582
    %626 = vmatpush1.msra.mxu0 %v581
    %627 = vmatprep.subr.mxu0 %v584
    %628 = vmatpush1.msra.mxu0 %v583
    %629 = vmatprep.subr.mxu0 0.0
    %630 = vmatpush1.msra.mxu0 0.0
    %631 = vmatprep.subr.mxu0 0.0
    %632 = vmatpush1.msra.mxu0 0.0
    %633 = vmatprep.subr.mxu0 0.0
    %634 = vmatpush1.msra.mxu0 0.0
    %635 = vmatprep.subr.mxu0 0.0
    %636 = vmatpush1.msra.mxu0 0.0
    %637 = vmatprep.subr.mxu0 0.0
    %638 = vmatpush1.msra.mxu0 0.0
    %639 = vmatprep.subr.mxu0 0.0
    %640 = vmatpush1.msra.mxu0 0.0
    %641 = vmatprep.subr.mxu0 0.0
    %642 = vmatpush1.msra.mxu0 0.0
    %643 = vmatprep.subr.mxu0 0.0
    %644 = vmatpush1.msra.mxu0 0.0
    %645 = vmatprep.subr.mxu0 0.0
    %646 = vmatpush1.msra.mxu0 0.0
    %647 = vmatprep.subr.mxu0 0.0
    %648 = vmatpush1.msra.mxu0 0.0
    %649 = vmatprep.subr.mxu0 0.0
    %650 = vmatpush1.msra.mxu0 0.0
    %651 = vmatprep.subr.mxu0 0.0
    %652 = vmatpush1.msra.mxu0 0.0
    %653 = vmatprep.subr.mxu0 0.0
    %654 = vmatpush1.msra.mxu0 0.0
    %655 = vmatprep.subr.mxu0 0.0
    %656 = vmatpush1.msra.mxu0 0.0
    %657 = vmatprep.subr.mxu0 0.0
    %658 = vmatpush1.msra.mxu0 0.0
    %659 = vmatprep.subr.mxu0 0.0
    %660 = vmatpush1.msra.mxu0 0.0
    %661 = vmatprep.mubr.f32.mxu0 0.0
    %662 = vmatmul.mubr.f32.gmra.mrb[0].mxu0 %v552
    %v663 = vpop.f32.mrb[0].mxu0
    %v664 = vadd.f32 %v590, %v663
    %v665 = vpop.f32.mrb[0].mxu0
    %v666 = vadd.f32 %v594, %v665
    %667 = vdwg.mxu0
    %v668 = vld [vmem:[%s2 + $0x4] sm:$0x1]
    %v669 = vxor.u32 %v664, 2147483648
    %v670 = vmul.f32 %v669, 1.442695
    %v671 = vpow.pop %v670
    %v672 = vadd.f32 %v671, 1.0
    %v673 = vrcp.pop %v672
    %v674 = vmul.f32 1.0, %v673
    %v676 = vlaneseq
    %v677 = vshrl.u32 %v676, 7
    %v678 = vsub.s32 0, %v677
    %v679 = vrot.slane %v668, %v678
    %v681 = vadd.f32 %v674, %v679
    %682 = vst [vmem:[%s3] sm:$0xff] %v681
    %v683 = vmul.f32 %v666, 0.5
    %v684 = vmul.f32 %v666, 0.70710677
    %v685 = verf.f32.pop %v684
    %v686 = vadd.f32 %v685, 1.0
    %v687 = vmul.f32 %v683, %v686
    %688 = vst [vmem:[%s3 + $0x8] sm:$0xff] %v687
    // Predicated region
    $region18: #{apply_fn.1} parent=1 // pred_check
      _
    $region19: #{apply_fn.1} parent=1 // pred_check_branch
      %690 = sbr.rel (0) target = $region21
    $region20: #{apply_fn.1} parent=1 // pred_region
      _
    $region21: #{apply_fn.1} parent=1 // pred_fallthru
      _
    // Predicated region
    $region22: #{apply_fn.1} parent=1 // pred_check
      _
    $region23: #{apply_fn.1} parent=1 // pred_check_branch
      %692 = sbr.rel (0) target = $region25
    $region24: #{apply_fn.1} parent=1 // pred_region
      _
    $region25: #{apply_fn.1} parent=1 // pred_fallthru
      _
    %693 = vsyncpa [#allocation3], 1

</llo_original>
